<compile_context>
chip_gen: v7x
topology: tpu7x:2x2x1
jax: 0.10.0
libtpu: 0.0.40
codegen_flags: <defaults>
</compile_context>

<pallas_src>
import jax
import jax.numpy as jnp
from jax.experimental import pallas as pl
from jax.experimental.pallas import tpu as pltpu

F32_EPS = float(jnp.finfo(jnp.float32).eps)  # torch.finfo(torch.float32).eps
_NEG_BIG = -1e30                             # padded logit columns -> exp() == 0
_LANE = 128
_MIN_TC_ROWS = 512                           # min rows/TC worth a 2-way v7x split


def _round_up(x, m):
    return (x + m - 1) // m * m


def _ceil_div(a, b):
    return -(-a // b)


# --------------------------------------------------------------------------- #
# Kernel
# --------------------------------------------------------------------------- #
def sac_actor_kernel(s_ref, w1_ref, b1_ref, w2_ref, b2_ref, w3_ref, b3_ref,
                     prob_ref, logp_ref):
    A = prob_ref.shape[-1]                                            # true action dim
    x = s_ref[...]                                                    # (TB, S) f32
    wdt = w1_ref.dtype                                                # f32 or bf16
    # (if wdt == f32 the astype's below are no-ops; keep them that way)

    # layer1 + relu
    h1 = jnp.dot(x.astype(wdt), w1_ref[...], preferred_element_type=jnp.float32)
    h1 = jnp.maximum(h1 + b1_ref[...], 0.0)                           # (TB, F1)

    # layer2 + relu
    h2 = jnp.dot(h1.astype(wdt), w2_ref[...], preferred_element_type=jnp.float32)
    h2 = jnp.maximum(h2 + b2_ref[...], 0.0)                           # (TB, F2)

    # layer3 logits on a full 128-lane vreg; padded columns carry a -1e30 bias
    # so they contribute exp()==0 to the softmax.
    logits = jnp.dot(h2.astype(wdt), w3_ref[...], preferred_element_type=jnp.float32)
    logits = logits + b3_ref[...]                                     # (TB, A_pad)

    # numerically-stable softmax over the last axis (== torch dim=1)
    m = jnp.max(logits, axis=-1, keepdims=True)
    e = jnp.exp(logits - m)
    denom = jnp.sum(e, axis=-1, keepdims=True)
    probs = e / denom                       # exact divide: rows sum to 1 (f32)

    probs_a = probs[:, :A]                  # only real action columns hit HBM
    prob_ref[...] = probs_a
    logp_ref[...] = jnp.log(probs_a + F32_EPS)   # torch: log(p + eps)


# --------------------------------------------------------------------------- #
# One-time parameter preparation (hoisted out of the per-call hot path)
# --------------------------------------------------------------------------- #
def prepare_params(params, *, weight_dtype=jnp.float32):
    """Pad layer-3 to a full 128-lane vreg and cast weights once.

    Call this when parameters are created/updated, NOT per forward step.
    Weights are (in, out); biases are (1, out).  bf16 weights are valid on
    v5e / v6e / v7x (MXU is bf16-native); biases stay f32.
    """
    w1, b1, w2, b2, w3, b3 = (params["w1"], params["b1"], params["w2"],
                              params["b2"], params["w3"], params["b3"])
    A = w3.shape[1]
    A_pad = _round_up(A, _LANE)
    w3_p = jnp.pad(w3, ((0, 0), (0, A_pad - A)))
    b3_p = jnp.pad(b3, ((0, 0), (0, A_pad - A)), constant_values=_NEG_BIG)
    return {
        "w1": w1.astype(weight_dtype), "b1": b1.astype(jnp.float32),
        "w2": w2.astype(weight_dtype), "b2": b2.astype(jnp.float32),
        "w3": w3_p.astype(weight_dtype), "b3": b3_p.astype(jnp.float32),
        "action_size": A,
    }


# --------------------------------------------------------------------------- #
# Forward wrapper
# --------------------------------------------------------------------------- #
def sac_actor_forward(state, prep, *, batch_tile=1024):
    """state: (B, state_size) f32; prep: output of prepare_params().

    Returns (action_prob, log_prob), each (B, action_size) f32.
    """
    w1, b1, w2, b2, w3, b3 = (prep["w1"], prep["b1"], prep["w2"],
                              prep["b2"], prep["w3"], prep["b3"])
    A = prep["action_size"]
    B, S = state.shape
    F1 = w1.shape[1]
    F2 = w2.shape[1]
    A_pad = w3.shape[1]

    # --- batch tiling: 8-aligned tiles, balanced (even) grid for v7x's 2 TCs --
    batch_tile = max(8, _round_up(int(batch_tile), 8))
    B8 = _round_up(B, 8)
    n_steps = _ceil_div(B8, batch_tile)
    if n_steps == 1 and B8 >= 2 * _MIN_TC_ROWS:
        n_steps = 2                       # big single tile -> split across 2 TCs
    elif n_steps > 1 and n_steps % 2:
        n_steps += 1                      # even number of roughly equal steps
    TB = _round_up(_ceil_div(B8, n_steps), 8)
    B_pad = TB * n_steps

    state_p = state if B_pad == B else jnp.pad(state, ((0, B_pad - B), (0, 0)))

    grid = (n_steps,)
    in_specs = [
        pl.BlockSpec((TB, S), lambda i: (i, 0)),       # state: blocked over batch
        pl.BlockSpec((S, F1), lambda i: (0, 0)),       # weights/biases: resident
        pl.BlockSpec((1, F1), lambda i: (0, 0)),
        pl.BlockSpec((F1, F2), lambda i: (0, 0)),
        pl.BlockSpec((1, F2), lambda i: (0, 0)),
        pl.BlockSpec((F2, A_pad), lambda i: (0, 0)),
        pl.BlockSpec((1, A_pad), lambda i: (0, 0)),
    ]
    # Output last block dim == full array dim (A), so the narrow block is legal;
    # per-row output traffic is 2*A*4 bytes instead of 2*128*4 bytes.
    out_specs = (
        pl.BlockSpec((TB, A), lambda i: (i, 0)),
        pl.BlockSpec((TB, A), lambda i: (i, 0)),
    )
    out_shapes = (
        jax.ShapeDtypeStruct((B_pad, A), jnp.float32),  # action_prob
        jax.ShapeDtypeStruct((B_pad, A), jnp.float32),  # log_prob
    )

    wbytes = jnp.dtype(w1.dtype).itemsize
    cost = pl.CostEstimate(
        flops=int(2 * B_pad * (S * F1 + F1 * F2 + F2 * A_pad)
                  + 6 * B_pad * (F1 + F2 + 4 * A_pad)),
        transcendentals=int(B_pad * (A_pad + A)),
        bytes_accessed=int(4 * (B_pad * S + 2 * B_pad * A)
                           + wbytes * (w1.size + w2.size + w3.size)
                           + 4 * (b1.size + b2.size + b3.size)),
    )

    prob_p, logp_p = pl.pallas_call(
        sac_actor_kernel,
        out_shape=out_shapes,
        grid=grid,
        in_specs=in_specs,
        out_specs=out_specs,
        compiler_params=pltpu.CompilerParams(dimension_semantics=("parallel",)),
        cost_estimate=cost,
    )(state_p, w1, b1, w2, b2, w3, b3)

    if B_pad == B:
        return prob_p, logp_p
    return prob_p[:B], logp_p[:B]


# --------------------------------------------------------------------------- #
# Init + pure-JAX reference
# --------------------------------------------------------------------------- #
def init_params(key, state_size, action_size, fc_1=64, fc_2=64):
    """Deterministic init mimicking nn.Linear defaults (uniform +/- 1/sqrt(fan_in)).
    Weights stored as (in, out); biases as (1, out)."""
    ks = jax.random.split(key, 6)

    def lin(kw, kb, fan_in, fan_out):
        bound = 1.0 / jnp.sqrt(float(fan_in))
        w = jax.random.uniform(kw, (fan_in, fan_out), jnp.float32, -bound, bound)
        b = jax.random.uniform(kb, (1, fan_out), jnp.float32, -bound, bound)
        return w, b

    w1, b1 = lin(ks[0], ks[1], state_size, fc_1)
    w2, b2 = lin(ks[2], ks[3], fc_1, fc_2)
    w3, b3 = lin(ks[4], ks[5], fc_2, action_size)
    return {"w1": w1, "b1": b1, "w2": w2, "b2": b2, "w3": w3, "b3": b3}


def _ref_forward(state, p):
    """Plain-JAX reference: same math as the PyTorch forward."""
    h1 = jnp.maximum(state @ p["w1"] + p["b1"], 0.0)
    h2 = jnp.maximum(h1 @ p["w2"] + p["b2"], 0.0)
    logits = h2 @ p["w3"] + p["b3"]
    prob = jax.nn.softmax(logits, axis=1)
    return prob, jnp.log(prob + F32_EPS)


if __name__ == "__main__":
    # Small shapes consistent with the module's forward pass.
    batch, state_size, action_size = 8, 16, 4
    fc_1, fc_2 = 64, 64

    key = jax.random.PRNGKey(0)
    k_state, k_params = jax.random.split(key)

    state = jax.random.normal(k_state, (batch, state_size), jnp.float32)
    params = init_params(k_params, state_size, action_size, fc_1, fc_2)
    ref_prob, ref_logp = _ref_forward(state, params)

    # --- f32-weight path -------------------------------------------------------
    prep_f32 = prepare_params(params)                 # one-time pad/cast
    action_prob, log_prob = sac_actor_forward(state, prep_f32)
    jax.block_until_ready((action_prob, log_prob))
    assert action_prob.shape == (batch, action_size)
    assert log_prob.shape == (batch, action_size)
    # Tolerance vs. the XLA reference is dominated by matmul rounding-mode
    # differences, not the softmax (which now uses an exact divide).
    assert jnp.allclose(action_prob, ref_prob, atol=1e-2), "action_prob mismatch"
    assert jnp.allclose(log_prob, ref_logp, atol=2e-2), "log_prob mismatch"
    # Exact divide: rows sum to 1 at f32 precision regardless of matmul mode.
    assert jnp.allclose(jnp.sum(action_prob, axis=1), 1.0, atol=1e-5)

    # --- bf16-weight path (valid on v5e / v6e / v7x; f32 accumulation) ---------
    prep_bf16 = prepare_params(params, weight_dtype=jnp.bfloat16)
    prob_bf16, logp_bf16 = sac_actor_forward(state, prep_bf16)
    jax.block_until_ready((prob_bf16, logp_bf16))
    assert jnp.allclose(prob_bf16, ref_prob, atol=5e-2), "bf16 action_prob mismatch"
    assert jnp.all(jnp.isfinite(logp_bf16))
    assert jnp.allclose(jnp.sum(prob_bf16, axis=1), 1.0, atol=1e-5)

    # --- larger ragged batch: exercises the balanced batch grid ----------------
    # B=272, batch_tile=128 -> 4 even steps of 72 rows (grid=(4,), "parallel"),
    # so both v7x TensorCores get equal work; padded rows are sliced off.
    big_B = 272
    big_state = jax.random.normal(jax.random.PRNGKey(1), (big_B, state_size),
                                  jnp.float32)
    big_prob, big_logp = sac_actor_forward(big_state, prep_f32, batch_tile=128)
    jax.block_until_ready((big_prob, big_logp))
    big_ref_prob, big_ref_logp = _ref_forward(big_state, params)
    assert big_prob.shape == (big_B, action_size)
    assert jnp.allclose(big_prob, big_ref_prob, atol=1e-2), "grid action_prob mismatch"
    assert jnp.allclose(big_logp, big_ref_logp, atol=2e-2), "grid log_prob mismatch"
    assert jnp.allclose(jnp.sum(big_prob, axis=1), 1.0, atol=1e-5)

    # --- non-multiple-of-8 caller tile: TB is clamped to a multiple of 8 -------
    odd_prob, odd_logp = sac_actor_forward(big_state, prep_f32, batch_tile=100)
    jax.block_until_ready((odd_prob, odd_logp))
    assert jnp.allclose(odd_prob, big_ref_prob, atol=1e-2), "odd-tile mismatch"

    # TODO(synk): SACActor.sample() (Categorical sampling) is not part of forward();
    # not implemented as a kernel.
    print("KERNEL_OK")
</pallas_src>

<mosaic_0001>
module attributes {stable_mosaic.version = 11 : i64} {
  func.func @sac_actor_kernel(%arg0: i32, %arg1: memref<8x16xf32, #tpu.memory_space<vmem>>, %arg2: memref<16x64xf32, #tpu.memory_space<vmem>>, %arg3: memref<1x64xf32, #tpu.memory_space<vmem>>, %arg4: memref<64x64xf32, #tpu.memory_space<vmem>>, %arg5: memref<1x64xf32, #tpu.memory_space<vmem>>, %arg6: memref<64x128xf32, #tpu.memory_space<vmem>>, %arg7: memref<1x128xf32, #tpu.memory_space<vmem>>, %arg8: memref<8x4xf32, #tpu.memory_space<vmem>>, %arg9: memref<8x4xf32, #tpu.memory_space<vmem>>) attributes {dimension_semantics = [#tpu.dimension_semantics<parallel>], iteration_bounds = array<i64: 1>, scalar_prefetch = 0 : i64, scratch_operands = 0 : i64, tpu.core_type = #tpu.core_type<tc>, window_params = [{transform_indices = @transform_0, window_bounds = array<i64: 8, 16>}, {pipeline_mode = #tpu.pipeline_mode<synchronous>, transform_indices = @transform_1, window_bounds = array<i64: 16, 64>}, {pipeline_mode = #tpu.pipeline_mode<synchronous>, transform_indices = @transform_2, window_bounds = array<i64: 1, 64>}, {pipeline_mode = #tpu.pipeline_mode<synchronous>, transform_indices = @transform_3, window_bounds = array<i64: 64, 64>}, {pipeline_mode = #tpu.pipeline_mode<synchronous>, transform_indices = @transform_4, window_bounds = array<i64: 1, 64>}, {pipeline_mode = #tpu.pipeline_mode<synchronous>, transform_indices = @transform_5, window_bounds = array<i64: 64, 128>}, {pipeline_mode = #tpu.pipeline_mode<synchronous>, transform_indices = @transform_6, window_bounds = array<i64: 1, 128>}, {transform_indices = @transform_7, window_bounds = array<i64: 8, 4>}, {transform_indices = @transform_8, window_bounds = array<i64: 8, 4>}]} {
    %c0 = arith.constant 0 : index
    %c0_0 = arith.constant 0 : index
    %0 = vector.load %arg1[%c0, %c0_0] : memref<8x16xf32, #tpu.memory_space<vmem>>, vector<8x16xf32>
    %c0_1 = arith.constant 0 : index
    %c0_2 = arith.constant 0 : index
    %1 = vector.load %arg2[%c0_1, %c0_2] : memref<16x64xf32, #tpu.memory_space<vmem>>, vector<16x64xf32>
    %cst = arith.constant dense<0.000000e+00> : vector<8x64xf32>
    %2 = tpu.matmul %0, %1, %cst {dimension_numbers = #tpu.dot_dimension_numbers<[1], [0], [0], [1], [0, 0, 1, 1], [], []>} : vector<8x16xf32>, vector<16x64xf32>, vector<8x64xf32> -> vector<8x64xf32>
    %c0_3 = arith.constant 0 : index
    %c0_4 = arith.constant 0 : index
    %3 = vector.load %arg3[%c0_3, %c0_4] : memref<1x64xf32, #tpu.memory_space<vmem>>, vector<1x64xf32>
    %4 = vector.broadcast %3 : vector<1x64xf32> to vector<8x64xf32>
    %5 = arith.addf %2, %4 : vector<8x64xf32>
    %cst_5 = arith.constant 0.000000e+00 : f32
    %6 = vector.broadcast %cst_5 : f32 to vector<8x64xf32>
    %7 = arith.maximumf %5, %6 : vector<8x64xf32>
    %c0_6 = arith.constant 0 : index
    %c0_7 = arith.constant 0 : index
    %8 = vector.load %arg4[%c0_6, %c0_7] : memref<64x64xf32, #tpu.memory_space<vmem>>, vector<64x64xf32>
    %cst_8 = arith.constant dense<0.000000e+00> : vector<8x64xf32>
    %9 = tpu.matmul %7, %8, %cst_8 {dimension_numbers = #tpu.dot_dimension_numbers<[1], [0], [0], [1], [0, 0, 1, 1], [], []>} : vector<8x64xf32>, vector<64x64xf32>, vector<8x64xf32> -> vector<8x64xf32>
    %c0_9 = arith.constant 0 : index
    %c0_10 = arith.constant 0 : index
    %10 = vector.load %arg5[%c0_9, %c0_10] : memref<1x64xf32, #tpu.memory_space<vmem>>, vector<1x64xf32>
    %11 = vector.broadcast %10 : vector<1x64xf32> to vector<8x64xf32>
    %12 = arith.addf %9, %11 : vector<8x64xf32>
    %cst_11 = arith.constant 0.000000e+00 : f32
    %13 = vector.broadcast %cst_11 : f32 to vector<8x64xf32>
    %14 = arith.maximumf %12, %13 : vector<8x64xf32>
    %c0_12 = arith.constant 0 : index
    %c0_13 = arith.constant 0 : index
    %15 = vector.load %arg6[%c0_12, %c0_13] : memref<64x128xf32, #tpu.memory_space<vmem>>, vector<64x128xf32>
    %cst_14 = arith.constant dense<0.000000e+00> : vector<8x128xf32>
    %16 = tpu.matmul %14, %15, %cst_14 {dimension_numbers = #tpu.dot_dimension_numbers<[1], [0], [0], [1], [0, 0, 1, 1], [], []>} : vector<8x64xf32>, vector<64x128xf32>, vector<8x128xf32> -> vector<8x128xf32>
    %c0_15 = arith.constant 0 : index
    %c0_16 = arith.constant 0 : index
    %17 = vector.load %arg7[%c0_15, %c0_16] : memref<1x128xf32, #tpu.memory_space<vmem>>, vector<1x128xf32>
    %18 = vector.broadcast %17 : vector<1x128xf32> to vector<8x128xf32>
    %19 = arith.addf %16, %18 : vector<8x128xf32>
    %cst_17 = arith.constant dense<0xFF800000> : vector<8xf32>
    %20 = vector.multi_reduction <maximumf>, %19, %cst_17 [1] : vector<8x128xf32> to vector<8xf32>
    %21 = vector.shape_cast %20 : vector<8xf32> to vector<8x1xf32>
    %22 = vector.broadcast %21 : vector<8x1xf32> to vector<8x128xf32>
    %23 = arith.subf %19, %22 : vector<8x128xf32>
    %24 = math.exp %23 : vector<8x128xf32>
    %cst_18 = arith.constant dense<0.000000e+00> : vector<8xf32>
    %25 = vector.multi_reduction <add>, %24, %cst_18 [1] : vector<8x128xf32> to vector<8xf32>
    %26 = vector.shape_cast %25 : vector<8xf32> to vector<8x1xf32>
    %27 = vector.broadcast %26 : vector<8x1xf32> to vector<8x128xf32>
    %28 = arith.divf %24, %27 : vector<8x128xf32>
    %29 = vector.extract_strided_slice %28 {offsets = [0, 0], sizes = [8, 4], strides = [1, 1]} : vector<8x128xf32> to vector<8x4xf32>
    %c0_19 = arith.constant 0 : index
    %c0_20 = arith.constant 0 : index
    %30 = vector.load %arg8[%c0_19, %c0_20] : memref<8x4xf32, #tpu.memory_space<vmem>>, vector<8x4xf32>
    tpu.vector_store %arg8[%c0_19, %c0_20], %29 {strides = array<i32>} : memref<8x4xf32, #tpu.memory_space<vmem>>, vector<8x4xf32>,
    %cst_21 = arith.constant 1.1920929E-7 : f32
    %31 = vector.broadcast %cst_21 : f32 to vector<8x4xf32>
    %32 = arith.addf %29, %31 : vector<8x4xf32>
    %33 = math.log %32 : vector<8x4xf32>
    %c0_22 = arith.constant 0 : index
    %c0_23 = arith.constant 0 : index
    %34 = vector.load %arg9[%c0_22, %c0_23] : memref<8x4xf32, #tpu.memory_space<vmem>>, vector<8x4xf32>
    tpu.vector_store %arg9[%c0_22, %c0_23], %33 {strides = array<i32>} : memref<8x4xf32, #tpu.memory_space<vmem>>, vector<8x4xf32>,
    return
  }
  func.func @transform_0(%arg0: i32) -> (i32, i32) {
    %c0_i32 = arith.constant 0 : i32
    %c0_i32_0 = arith.constant 0 : i32
    return %arg0, %c0_i32 : i32, i32
  }
  func.func @transform_1(%arg0: i32) -> (i32, i32) {
    %c0_i32 = arith.constant 0 : i32
    %c0_i32_0 = arith.constant 0 : i32
    %c0_i32_1 = arith.constant 0 : i32
    return %c0_i32, %c0_i32_0 : i32, i32
  }
  func.func @transform_2(%arg0: i32) -> (i32, i32) {
    %c0_i32 = arith.constant 0 : i32
    %c0_i32_0 = arith.constant 0 : i32
    %c0_i32_1 = arith.constant 0 : i32
    return %c0_i32, %c0_i32_0 : i32, i32
  }
  func.func @transform_3(%arg0: i32) -> (i32, i32) {
    %c0_i32 = arith.constant 0 : i32
    %c0_i32_0 = arith.constant 0 : i32
    %c0_i32_1 = arith.constant 0 : i32
    return %c0_i32, %c0_i32_0 : i32, i32
  }
  func.func @transform_4(%arg0: i32) -> (i32, i32) {
    %c0_i32 = arith.constant 0 : i32
    %c0_i32_0 = arith.constant 0 : i32
    %c0_i32_1 = arith.constant 0 : i32
    return %c0_i32, %c0_i32_0 : i32, i32
  }
  func.func @transform_5(%arg0: i32) -> (i32, i32) {
    %c0_i32 = arith.constant 0 : i32
    %c0_i32_0 = arith.constant 0 : i32
    %c0_i32_1 = arith.constant 0 : i32
    return %c0_i32, %c0_i32_0 : i32, i32
  }
  func.func @transform_6(%arg0: i32) -> (i32, i32) {
    %c0_i32 = arith.constant 0 : i32
    %c0_i32_0 = arith.constant 0 : i32
    %c0_i32_1 = arith.constant 0 : i32
    return %c0_i32, %c0_i32_0 : i32, i32
  }
  func.func @transform_7(%arg0: i32) -> (i32, i32) {
    %c0_i32 = arith.constant 0 : i32
    %c0_i32_0 = arith.constant 0 : i32
    return %arg0, %c0_i32 : i32, i32
  }
  func.func @transform_8(%arg0: i32) -> (i32, i32) {
    %c0_i32 = arith.constant 0 : i32
    %c0_i32_0 = arith.constant 0 : i32
    return %arg0, %c0_i32 : i32, i32
  }
}

</mosaic_0001>

<llo_original>
// kernel: tpu_custom_call.1
$region0: #{tpu_custom_call.1}
  #allocation0 [shape = 'u32[]', space=smem, size = 0x4, offset = 0x4, fixed_abs, tag = 'smem constant byte address 0x4 - core index']
  #allocation1 [shape = 'u32[144,128]{1,0:T(1,128)}', space=vmem, size = 0x12000, scoped, tag = 'internal scratch']
  %s0 = inlined_call_operand.hbm [shape: f32[8,16], index: 0, kind: input, shape index: {}]
  %s1 = inlined_call_operand.hbm [shape: f32[16,64], index: 1, kind: input, shape index: {}]
  %s2 = inlined_call_operand.vmem [shape: f32[1,64], index: 2, kind: input, shape index: {}]
  %s3 = inlined_call_operand.hbm [shape: f32[64,64], index: 3, kind: input, shape index: {}]
  %s4 = inlined_call_operand.vmem [shape: f32[1,64], index: 4, kind: input, shape index: {}]
  %s5 = inlined_call_operand.hbm [shape: f32[64,128], index: 5, kind: input, shape index: {}]
  %s6 = inlined_call_operand.vmem [shape: f32[1,128], index: 6, kind: input, shape index: {}]
  %s7 = inlined_call_operand.vmem [shape: f32[8,4], index: 7, kind: output, shape index: {0}]
  %s8 = inlined_call_operand.vmem [shape: f32[8,4], index: 8, kind: output, shape index: {1}]
  %9 = xla_tuple %s7, %s8
  %s10 = sld [smem:[#allocation0]]
  $region62: #{tpu_custom_call.1} parent=0
    _
  %s12 = ssub.s32 1, %s10
  %s13 = scalar_select 0, %s12, %s10
  $region1: #{tpu_custom_call.1} parent=0
    #allocation2 [shape = 'u8[4096]{0}', space=vmem, size = 0x1000, scoped, tag = 'input window, operand 0, single buffered']
    #allocation3 [shape = 's32[1]{0}', space=sflag, size = 0x4, scoped, tag = 'scoped memory for tpu_custom_call.1']
    #allocation4 [shape = 'u8[8192]{0}', space=vmem, size = 0x2000, scoped, tag = 'input window, operand 1, single buffered']
    #allocation5 [shape = 's32[1]{0}', space=sflag, size = 0x4, scoped, tag = 'scoped memory for tpu_custom_call.1']
    #allocation6 [shape = 'u8[32768]{0}', space=vmem, size = 0x8000, scoped, tag = 'input window, operand 3, single buffered']
    #allocation7 [shape = 'u8[32768]{0}', space=vmem, size = 0x8000, scoped, tag = 'input window, operand 5, single buffered']
    #allocation8 [shape = 's32[1]{0}', space=sflag, size = 0x4, scoped, tag = 'scoped memory for tpu_custom_call.1']
    %14 = vsyncpa [#allocation3], 0
    %15 = vsyncpa [#allocation5], 0
    %16 = vsyncpa [#allocation8], 0
    // Predicated region
    $region2: #{tpu_custom_call.1} parent=1 // pred_check
      _
    $region3: #{tpu_custom_call.1} parent=1 // pred_check_branch
      %18 = sbr.rel (0) target = $region5
    $region4: #{tpu_custom_call.1} parent=1 // pred_region
      %s20 = ssub.s32 128, 128
      %21 = vsyncadd [#allocation3], %s20
      %s23 = sshll.u32 [#allocation2], 4
      %s24 = int_to_ptr.vmem [resolvable:$true] %s23
      %26 = dma.hbm_to_vmem [thread:$0]  %s0, 128, %s24, [#allocation3]
    $region5: #{tpu_custom_call.1} parent=1 // pred_fallthru
      _
    // Predicated region
    $region6: #{tpu_custom_call.1} parent=1 // pred_check
      _
    $region7: #{tpu_custom_call.1} parent=1 // pred_check_branch
      %28 = sbr.rel (0) target = $region9
    $region8: #{tpu_custom_call.1} parent=1 // pred_region
      %s30 = ssub.s32 256, 256
      %31 = vsyncadd [#allocation5], %s30
      %s32 = sshll.u32 [#allocation4], 4
      %s33 = int_to_ptr.vmem [resolvable:$true] %s32
      %38 = dma.hbm_to_vmem [thread:$0]  %s1, 256, %s33, [#allocation5], 128, 128, 8
    $region9: #{tpu_custom_call.1} parent=1 // pred_fallthru
      _
    // Predicated region
    $region10: #{tpu_custom_call.1} parent=1 // pred_check
      _
    $region11: #{tpu_custom_call.1} parent=1 // pred_check_branch
      %40 = sbr.rel (0) target = $region13
    $region12: #{tpu_custom_call.1} parent=1 // pred_region
      _
    $region13: #{tpu_custom_call.1} parent=1 // pred_fallthru
      _
    // Predicated region
    $region14: #{tpu_custom_call.1} parent=1 // pred_check
      _
    $region15: #{tpu_custom_call.1} parent=1 // pred_check_branch
      %42 = sbr.rel (0) target = $region17
    $region16: #{tpu_custom_call.1} parent=1 // pred_region
      %s44 = ssub.s32 1024, 1024
      %45 = vsyncadd [#allocation5], %s44
      %s46 = sshll.u32 [#allocation6], 4
      %s47 = int_to_ptr.vmem [resolvable:$true] %s46
      %52 = dma.hbm_to_vmem [thread:$0]  %s3, 1024, %s47, [#allocation5], 128, 128, 8
    $region17: #{tpu_custom_call.1} parent=1 // pred_fallthru
      _
    // Predicated region
    $region18: #{tpu_custom_call.1} parent=1 // pred_check
      _
    $region19: #{tpu_custom_call.1} parent=1 // pred_check_branch
      %54 = sbr.rel (0) target = $region21
    $region20: #{tpu_custom_call.1} parent=1 // pred_region
      _
    $region21: #{tpu_custom_call.1} parent=1 // pred_fallthru
      _
    // Predicated region
    $region22: #{tpu_custom_call.1} parent=1 // pred_check
      _
    $region23: #{tpu_custom_call.1} parent=1 // pred_check_branch
      %56 = sbr.rel (0) target = $region25
    $region24: #{tpu_custom_call.1} parent=1 // pred_region
      %s58 = ssub.s32 1024, 1024
      %59 = vsyncadd [#allocation8], %s58
      %s60 = sshll.u32 [#allocation7], 4
      %s61 = int_to_ptr.vmem [resolvable:$true] %s60
      %66 = dma.hbm_to_vmem [thread:$0]  %s5, 1024, %s61, [#allocation8], 128, 128, 8
    $region25: #{tpu_custom_call.1} parent=1 // pred_fallthru
      _
    // Predicated region
    $region26: #{tpu_custom_call.1} parent=1 // pred_check
      _
    $region27: #{tpu_custom_call.1} parent=1 // pred_check_branch
      %68 = sbr.rel (0) target = $region29
    $region28: #{tpu_custom_call.1} parent=1 // pred_region
      _
    $region29: #{tpu_custom_call.1} parent=1 // pred_fallthru
      _
    // Predicated region
    $region30: #{tpu_custom_call.1} parent=1 // pred_check
      _
    $region31: #{tpu_custom_call.1} parent=1 // pred_check_branch
      %70 = sbr.rel (0) target = $region33
    $region32: #{tpu_custom_call.1} parent=1 // pred_region
      %71 = dma.done [#allocation3], 128
    $region33: #{tpu_custom_call.1} parent=1 // pred_fallthru
      _
    // Predicated region
    $region34: #{tpu_custom_call.1} parent=1 // pred_check
      _
    $region35: #{tpu_custom_call.1} parent=1 // pred_check_branch
      %73 = sbr.rel (0) target = $region37
    $region36: #{tpu_custom_call.1} parent=1 // pred_region
      %74 = dma.done [#allocation5], 256
    $region37: #{tpu_custom_call.1} parent=1 // pred_fallthru
      _
    // Predicated region
    $region38: #{tpu_custom_call.1} parent=1 // pred_check
      _
    $region39: #{tpu_custom_call.1} parent=1 // pred_check_branch
      %76 = sbr.rel (0) target = $region41
    $region40: #{tpu_custom_call.1} parent=1 // pred_region
      %77 = dma.done [#allocation5], 1024
    $region41: #{tpu_custom_call.1} parent=1 // pred_fallthru
      _
    // Predicated region
    $region42: #{tpu_custom_call.1} parent=1 // pred_check
      _
    $region43: #{tpu_custom_call.1} parent=1 // pred_check_branch
      %79 = sbr.rel (0) target = $region45
    $region44: #{tpu_custom_call.1} parent=1 // pred_region
      %80 = dma.done [#allocation8], 1024
    $region45: #{tpu_custom_call.1} parent=1 // pred_fallthru
      _
    %v81 = vld [vmem:[#allocation2] sm:$0xff]
    %v82 = vld [vmem:[#allocation4] sm:$0xff]
    %v83 = vld [vmem:[#allocation4 + $0x8] sm:$0xff]
    %v84 = vld [vmem:[%s2] sm:$0x1]
    %v86 = vlaneseq
    %v87 = vshrl.u32 %v86, 7
    %v88 = vsub.s32 0, %v87
    %v89 = vrot.slane %v84, %v88
    %vm91 = vcmask 130048
    %v93 = vsel %vm91, %v81, 0
    %95 = vmatprep.subr.mxu0 0.0
    %96 = vmatpush1.msra.mxu0 %v82
    %97 = vmatprep.subr.mxu0 0.0
    %98 = vmatpush1.msra.mxu0 %v83
    %99 = vmatprep.subr.mxu0 0.0
    %100 = vmatpush1.msra.mxu0 0.0
    %101 = vmatprep.subr.mxu0 0.0
    %102 = vmatpush1.msra.mxu0 0.0
    %103 = vmatprep.subr.mxu0 0.0
    %104 = vmatpush1.msra.mxu0 0.0
    %105 = vmatprep.subr.mxu0 0.0
    %106 = vmatpush1.msra.mxu0 0.0
    %107 = vmatprep.subr.mxu0 0.0
    %108 = vmatpush1.msra.mxu0 0.0
    %109 = vmatprep.subr.mxu0 0.0
    %110 = vmatpush1.msra.mxu0 0.0
    %111 = vmatprep.subr.mxu0 0.0
    %112 = vmatpush1.msra.mxu0 0.0
    %113 = vmatprep.subr.mxu0 0.0
    %114 = vmatpush1.msra.mxu0 0.0
    %115 = vmatprep.subr.mxu0 0.0
    %116 = vmatpush1.msra.mxu0 0.0
    %117 = vmatprep.subr.mxu0 0.0
    %118 = vmatpush1.msra.mxu0 0.0
    %119 = vmatprep.subr.mxu0 0.0
    %120 = vmatpush1.msra.mxu0 0.0
    %121 = vmatprep.subr.mxu0 0.0
    %122 = vmatpush1.msra.mxu0 0.0
    %123 = vmatprep.subr.mxu0 0.0
    %124 = vmatpush1.msra.mxu0 0.0
    %125 = vmatprep.subr.mxu0 0.0
    %126 = vmatpush1.msra.mxu0 0.0
    %127 = vmatprep.subr.mxu0 0.0
    %128 = vmatpush1.msra.mxu0 0.0
    %129 = vmatprep.subr.mxu0 0.0
    %130 = vmatpush1.msra.mxu0 0.0
    %131 = vmatprep.subr.mxu0 0.0
    %132 = vmatpush1.msra.mxu0 0.0
    %133 = vmatprep.subr.mxu0 0.0
    %134 = vmatpush1.msra.mxu0 0.0
    %135 = vmatprep.subr.mxu0 0.0
    %136 = vmatpush1.msra.mxu0 0.0
    %137 = vmatprep.subr.mxu0 0.0
    %138 = vmatpush1.msra.mxu0 0.0
    %139 = vmatprep.subr.mxu0 0.0
    %140 = vmatpush1.msra.mxu0 0.0
    %141 = vmatprep.subr.mxu0 0.0
    %142 = vmatpush1.msra.mxu0 0.0
    %143 = vmatprep.subr.mxu0 0.0
    %144 = vmatpush1.msra.mxu0 0.0
    %145 = vmatprep.subr.mxu0 0.0
    %146 = vmatpush1.msra.mxu0 0.0
    %147 = vmatprep.subr.mxu0 0.0
    %148 = vmatpush1.msra.mxu0 0.0
    %149 = vmatprep.subr.mxu0 0.0
    %150 = vmatpush1.msra.mxu0 0.0
    %151 = vmatprep.subr.mxu0 0.0
    %152 = vmatpush1.msra.mxu0 0.0
    %153 = vmatprep.subr.mxu0 0.0
    %154 = vmatpush1.msra.mxu0 0.0
    %155 = vmatprep.subr.mxu0 0.0
    %156 = vmatpush1.msra.mxu0 0.0
    %157 = vmatprep.subr.mxu0 0.0
    %158 = vmatpush1.msra.mxu0 0.0
    %159 = vmatprep.mubr.f32.mxu0 0.0
    %160 = vmatmul.mubr.f32.gmra.mrb[0].mxu0 %v93
    %v161 = vpop.f32.mrb[0].mxu0
    %v162 = vadd.f32 %v89, %v161
    %v163 = vpop.f32.mrb[0].mxu0
    %164 = vdwg.mxu0
    %v165 = vmax.f32 %v162, 0.0
    %v166 = vld [vmem:[#allocation6] sm:$0xff]
    %v167 = vld [vmem:[#allocation6 + $0x8] sm:$0xff]
    %v168 = vld [vmem:[#allocation6 + $0x10] sm:$0xff]
    %v169 = vld [vmem:[#allocation6 + $0x18] sm:$0xff]
    %v170 = vld [vmem:[#allocation6 + $0x20] sm:$0xff]
    %v171 = vld [vmem:[#allocation6 + $0x28] sm:$0xff]
    %v172 = vld [vmem:[#allocation6 + $0x30] sm:$0xff]
    %v173 = vld [vmem:[#allocation6 + $0x38] sm:$0xff]
    %v174 = vld [vmem:[%s4] sm:$0x1]
    %v176 = vlaneseq
    %v177 = vshrl.u32 %v176, 7
    %v178 = vsub.s32 0, %v177
    %v179 = vrot.slane %v174, %v178
    %vm181 = vcmask 523264
    %v183 = vsel %vm181, %v165, 0
    %185 = vmatprep.subr.mxu0 0.0
    %186 = vmatpush1.msra.mxu0 %v166
    %187 = vmatprep.subr.mxu0 0.0
    %188 = vmatpush1.msra.mxu0 %v167
    %189 = vmatprep.subr.mxu0 0.0
    %190 = vmatpush1.msra.mxu0 %v168
    %191 = vmatprep.subr.mxu0 0.0
    %192 = vmatpush1.msra.mxu0 %v169
    %193 = vmatprep.subr.mxu0 0.0
    %194 = vmatpush1.msra.mxu0 %v170
    %195 = vmatprep.subr.mxu0 0.0
    %196 = vmatpush1.msra.mxu0 %v171
    %197 = vmatprep.subr.mxu0 0.0
    %198 = vmatpush1.msra.mxu0 %v172
    %199 = vmatprep.subr.mxu0 0.0
    %200 = vmatpush1.msra.mxu0 %v173
    %201 = vmatprep.subr.mxu0 0.0
    %202 = vmatpush1.msra.mxu0 0.0
    %203 = vmatprep.subr.mxu0 0.0
    %204 = vmatpush1.msra.mxu0 0.0
    %205 = vmatprep.subr.mxu0 0.0
    %206 = vmatpush1.msra.mxu0 0.0
    %207 = vmatprep.subr.mxu0 0.0
    %208 = vmatpush1.msra.mxu0 0.0
    %209 = vmatprep.subr.mxu0 0.0
    %210 = vmatpush1.msra.mxu0 0.0
    %211 = vmatprep.subr.mxu0 0.0
    %212 = vmatpush1.msra.mxu0 0.0
    %213 = vmatprep.subr.mxu0 0.0
    %214 = vmatpush1.msra.mxu0 0.0
    %215 = vmatprep.subr.mxu0 0.0
    %216 = vmatpush1.msra.mxu0 0.0
    %217 = vmatprep.subr.mxu0 0.0
    %218 = vmatpush1.msra.mxu0 0.0
    %219 = vmatprep.subr.mxu0 0.0
    %220 = vmatpush1.msra.mxu0 0.0
    %221 = vmatprep.subr.mxu0 0.0
    %222 = vmatpush1.msra.mxu0 0.0
    %223 = vmatprep.subr.mxu0 0.0
    %224 = vmatpush1.msra.mxu0 0.0
    %225 = vmatprep.subr.mxu0 0.0
    %226 = vmatpush1.msra.mxu0 0.0
    %227 = vmatprep.subr.mxu0 0.0
    %228 = vmatpush1.msra.mxu0 0.0
    %229 = vmatprep.subr.mxu0 0.0
    %230 = vmatpush1.msra.mxu0 0.0
    %231 = vmatprep.subr.mxu0 0.0
    %232 = vmatpush1.msra.mxu0 0.0
    %233 = vmatprep.subr.mxu0 0.0
    %234 = vmatpush1.msra.mxu0 0.0
    %235 = vmatprep.subr.mxu0 0.0
    %236 = vmatpush1.msra.mxu0 0.0
    %237 = vmatprep.subr.mxu0 0.0
    %238 = vmatpush1.msra.mxu0 0.0
    %239 = vmatprep.subr.mxu0 0.0
    %240 = vmatpush1.msra.mxu0 0.0
    %241 = vmatprep.subr.mxu0 0.0
    %242 = vmatpush1.msra.mxu0 0.0
    %243 = vmatprep.subr.mxu0 0.0
    %244 = vmatpush1.msra.mxu0 0.0
    %245 = vmatprep.subr.mxu0 0.0
    %246 = vmatpush1.msra.mxu0 0.0
    %247 = vmatprep.subr.mxu0 0.0
    %248 = vmatpush1.msra.mxu0 0.0
    %249 = vmatprep.mubr.f32.mxu0 0.0
    %250 = vmatmul.mubr.f32.gmra.mrb[0].mxu0 %v183
    %v251 = vpop.f32.mrb[0].mxu0
    %v252 = vadd.f32 %v179, %v251
    %v253 = vpop.f32.mrb[0].mxu0
    %254 = vdwg.mxu0
    %v255 = vmax.f32 %v252, 0.0
    %v256 = vld [vmem:[#allocation7] sm:$0xff]
    %v257 = vld [vmem:[#allocation7 + $0x8] sm:$0xff]
    %v258 = vld [vmem:[#allocation7 + $0x10] sm:$0xff]
    %v259 = vld [vmem:[#allocation7 + $0x18] sm:$0xff]
    %v260 = vld [vmem:[#allocation7 + $0x20] sm:$0xff]
    %v261 = vld [vmem:[#allocation7 + $0x28] sm:$0xff]
    %v262 = vld [vmem:[#allocation7 + $0x30] sm:$0xff]
    %v263 = vld [vmem:[#allocation7 + $0x38] sm:$0xff]
    %v264 = vld [vmem:[%s6] sm:$0x1]
    %v266 = vlaneseq
    %v267 = vshrl.u32 %v266, 7
    %v268 = vsub.s32 0, %v267
    %v269 = vrot.slane %v264, %v268
    %v272 = vsel %vm181, %v255, 0
    %274 = vmatprep.subr.mxu0 0.0
    %275 = vmatpush1.msra.mxu0 %v256
    %276 = vmatprep.subr.mxu0 0.0
    %277 = vmatpush1.msra.mxu0 %v257
    %278 = vmatprep.subr.mxu0 0.0
    %279 = vmatpush1.msra.mxu0 %v258
    %280 = vmatprep.subr.mxu0 0.0
    %281 = vmatpush1.msra.mxu0 %v259
    %282 = vmatprep.subr.mxu0 0.0
    %283 = vmatpush1.msra.mxu0 %v260
    %284 = vmatprep.subr.mxu0 0.0
    %285 = vmatpush1.msra.mxu0 %v261
    %286 = vmatprep.subr.mxu0 0.0
    %287 = vmatpush1.msra.mxu0 %v262
    %288 = vmatprep.subr.mxu0 0.0
    %289 = vmatpush1.msra.mxu0 %v263
    %290 = vmatprep.subr.mxu0 0.0
    %291 = vmatpush1.msra.mxu0 0.0
    %292 = vmatprep.subr.mxu0 0.0
    %293 = vmatpush1.msra.mxu0 0.0
    %294 = vmatprep.subr.mxu0 0.0
    %295 = vmatpush1.msra.mxu0 0.0
    %296 = vmatprep.subr.mxu0 0.0
    %297 = vmatpush1.msra.mxu0 0.0
    %298 = vmatprep.subr.mxu0 0.0
    %299 = vmatpush1.msra.mxu0 0.0
    %300 = vmatprep.subr.mxu0 0.0
    %301 = vmatpush1.msra.mxu0 0.0
    %302 = vmatprep.subr.mxu0 0.0
    %303 = vmatpush1.msra.mxu0 0.0
    %304 = vmatprep.subr.mxu0 0.0
    %305 = vmatpush1.msra.mxu0 0.0
    %306 = vmatprep.subr.mxu0 0.0
    %307 = vmatpush1.msra.mxu0 0.0
    %308 = vmatprep.subr.mxu0 0.0
    %309 = vmatpush1.msra.mxu0 0.0
    %310 = vmatprep.subr.mxu0 0.0
    %311 = vmatpush1.msra.mxu0 0.0
    %312 = vmatprep.subr.mxu0 0.0
    %313 = vmatpush1.msra.mxu0 0.0
    %314 = vmatprep.subr.mxu0 0.0
    %315 = vmatpush1.msra.mxu0 0.0
    %316 = vmatprep.subr.mxu0 0.0
    %317 = vmatpush1.msra.mxu0 0.0
    %318 = vmatprep.subr.mxu0 0.0
    %319 = vmatpush1.msra.mxu0 0.0
    %320 = vmatprep.subr.mxu0 0.0
    %321 = vmatpush1.msra.mxu0 0.0
    %322 = vmatprep.subr.mxu0 0.0
    %323 = vmatpush1.msra.mxu0 0.0
    %324 = vmatprep.subr.mxu0 0.0
    %325 = vmatpush1.msra.mxu0 0.0
    %326 = vmatprep.subr.mxu0 0.0
    %327 = vmatpush1.msra.mxu0 0.0
    %328 = vmatprep.subr.mxu0 0.0
    %329 = vmatpush1.msra.mxu0 0.0
    %330 = vmatprep.subr.mxu0 0.0
    %331 = vmatpush1.msra.mxu0 0.0
    %332 = vmatprep.subr.mxu0 0.0
    %333 = vmatpush1.msra.mxu0 0.0
    %334 = vmatprep.subr.mxu0 0.0
    %335 = vmatpush1.msra.mxu0 0.0
    %336 = vmatprep.subr.mxu0 0.0
    %337 = vmatpush1.msra.mxu0 0.0
    %338 = vmatprep.mubr.f32.mxu0 0.0
    %339 = vmatmul.mubr.f32.gmra.mrb[0].mxu0 %v272
    %v340 = vpop.f32.mrb[0].mxu0
    %v341 = vadd.f32 %v269, %v340
    %v342 = vpop.f32.mrb[0].mxu0
    %343 = vdwg.mxu0
    %344 = vmax.xlane.f32.xlu0 %v341
    %v345 = vpop.xlane.xlu0 %344
    %v346 = vsub.f32 %v341, %v345
    %v347 = vmul.f32 %v346, 1.442695
    %v348 = vpow.pop %v347
    %349 = vadd.xlane.f32.xlu0 %v348
    %v350 = vpop.xlane.xlu0 %349
    %v351 = vrcp.pop %v350
    %v352 = vmul.f32 %v348, %v351
    %vm353 = vcmask 31744
    %354 = vst.msk [vmem:[%s7] sm:$0xff] %vm353, %v352
    %v355 = vadd.f32 %v352, 1.1920929e-07
    %v356 = vlog2.pop %v355
    %v357 = vmul.f32 %v356, 0.6931472
    %358 = vst.msk [vmem:[%s8] sm:$0xff] %vm353, %v357
    // Predicated region
    $region46: #{tpu_custom_call.1} parent=1 // pred_check
      _
    $region47: #{tpu_custom_call.1} parent=1 // pred_check_branch
      %360 = sbr.rel (0) target = $region49
    $region48: #{tpu_custom_call.1} parent=1 // pred_region
      _
    $region49: #{tpu_custom_call.1} parent=1 // pred_fallthru
      _
    // Predicated region
    $region50: #{tpu_custom_call.1} parent=1 // pred_check
      _
    $region51: #{tpu_custom_call.1} parent=1 // pred_check_branch
      %362 = sbr.rel (0) target = $region53
    $region52: #{tpu_custom_call.1} parent=1 // pred_region
      _
    $region53: #{tpu_custom_call.1} parent=1 // pred_fallthru
      _
    // Predicated region
    $region54: #{tpu_custom_call.1} parent=1 // pred_check
      _
    $region55: #{tpu_custom_call.1} parent=1 // pred_check_branch
      %364 = sbr.rel (0) target = $region57
    $region56: #{tpu_custom_call.1} parent=1 // pred_region
      _
    $region57: #{tpu_custom_call.1} parent=1 // pred_fallthru
      _
    // Predicated region
    $region58: #{tpu_custom_call.1} parent=1 // pred_check
      _
    $region59: #{tpu_custom_call.1} parent=1 // pred_check_branch
      %366 = sbr.rel (0) target = $region61
    $region60: #{tpu_custom_call.1} parent=1 // pred_region
      _
    $region61: #{tpu_custom_call.1} parent=1 // pred_fallthru
      _
    %367 = vsyncpa [#allocation3], 1
    %368 = vsyncpa [#allocation5], 1
    %369 = vsyncpa [#allocation8], 1

</llo_original>
